<compile_context>
chip_gen: v7x
topology: tpu7x:2x2x1
jax: 0.10.0
libtpu: 0.0.40
codegen_flags: <defaults>
</compile_context>

<pallas_src>
import functools

import jax
import jax.numpy as jnp
import numpy as np
from jax.experimental import pallas as pl
from jax.experimental.pallas import tpu as pltpu


def _round_up(x: int, m: int) -> int:
    return (x + m - 1) // m * m


def _hann_window(win_size: int) -> np.ndarray:
    # torch.hann_window default is periodic=True
    n = np.arange(win_size, dtype=np.float64)
    return 0.5 * (1.0 - np.cos(2.0 * np.pi * n / win_size))


def _stft_mag_kernel(rows_ref, bhi_ref, blo_ref, out_ref):
    # rows_ref: (win_rows, row_w) f32  row_w-wide slices of the padded waveform;
    #           frame t of this tile = concat(rows[t], ..., rows[t+R-1])
    # bhi_ref / blo_ref: (N, N) bf16 hi/lo split of the window-folded
    #           [cos | Nyquist | sin] real-DFT basis
    # out_ref:  (tT, F) magnitude spectrogram tile, F = N//2 + 1
    N = bhi_ref.shape[0]
    half = N // 2
    row_w = rows_ref.shape[1]
    R = N // row_w                     # static: N/hop (or 1 in fallback mode)
    tT = out_ref.shape[0]
    f32 = jnp.float32

    acc = jnp.zeros((tT, N), f32)
    for j in range(R):                 # small static unroll (R = 4 for defaults)
        xj = rows_ref[j:j + tT, :]                       # (tT, row_w) f32
        hj = xj.astype(jnp.bfloat16)
        lj = (xj - hj.astype(f32)).astype(jnp.bfloat16)  # residual, exact in f32
        bh = bhi_ref[j * row_w:(j + 1) * row_w, :]       # (row_w, N) bf16
        bl = blo_ref[j * row_w:(j + 1) * row_w, :]
        # Three bf16 MXU passes, f32 accumulate (lo*lo term is negligible).
        acc += jnp.dot(hj, bh, preferred_element_type=f32)
        acc += jnp.dot(hj, bl, preferred_element_type=f32)
        acc += jnp.dot(lj, bh, preferred_element_type=f32)

    re = acc[:, :half]          # real parts, f = 0..half-1
    im = acc[:, half:]          # lane 0 = Nyquist real part; lanes 1.. = imag
    lane = jax.lax.broadcasted_iota(jnp.int32, im.shape, 1)
    power = re * re + jnp.where(lane == 0, 0.0, im * im)   # imag(f=0) == 0

    # Lane-dense main store; in-kernel cast to the requested output dtype.
    out_ref[:, :half] = jnp.sqrt(jnp.maximum(power, 1e-7)).astype(out_ref.dtype)
    # Nyquist bin: purely real, single-column store.
    nyq = im[:, 0:1]
    out_ref[:, half:] = jnp.sqrt(jnp.maximum(nyq * nyq, 1e-7)).astype(out_ref.dtype)


class SpectrogramTransform:
    """JAX/Pallas port of the PyTorch SpectrogramTransform module."""

    def __init__(self, fft_size: int = 1024, hop_size: int = 256,
                 win_size: int = 800, frame_tile: int = 256):
        assert fft_size % 2 == 0, "fft_size must be even"
        assert win_size <= fft_size, "win_size must be <= fft_size"
        self.fft_size = fft_size
        self.hop_size = hop_size
        self.win_size = win_size
        # Max frames per grid step.  256 works well everywhere; 512 helps on
        # single-TensorCore v5e/v6e for long clips (fewer, longer MXU bursts).
        self.frame_tile = frame_tile

        N = fft_size
        half = N // 2

        # torch.stft zero-pads the (periodic Hann) window to n_fft, centered.
        win = _hann_window(win_size)
        lpad = (N - win_size) // 2
        window = np.pad(win, (lpad, N - win_size - lpad))            # (N,)
        self.window = jnp.asarray(window, dtype=jnp.float32)         # for reference impl

        # Fused, window-folded real-DFT basis (N, N):
        #   cols [0, half): win * cos(2*pi*n*f/N)
        #   col  half     : win * (-1)^n            (Nyquist real part)
        #   cols (half, N): win * sin(2*pi*n*f/N),  f = 1..half-1
        n = np.arange(N, dtype=np.float64)[:, None]
        f = np.arange(half, dtype=np.float64)[None, :]
        ang = 2.0 * np.pi * n * f / N
        cos_half = np.cos(ang)                                       # (N, half)
        sin_half = np.sin(ang)                                       # (N, half), col 0 == 0
        sin_half[:, 0] = np.where(np.arange(N) % 2 == 0, 1.0, -1.0)  # Nyquist
        basis = np.concatenate([cos_half, sin_half], axis=1) * window[:, None]

        # hi/lo bf16 split (basis = hi + lo up to second-order rounding).
        b32 = jnp.asarray(basis, dtype=jnp.float32)
        bhi = b32.astype(jnp.bfloat16)
        blo = (b32 - bhi.astype(jnp.float32)).astype(jnp.bfloat16)
        self.basis_hi = bhi                                          # (N, N) bf16
        self.basis_lo = blo                                          # (N, N) bf16

    @functools.partial(jax.jit, static_argnums=0)
    def __call__(self, waveform: jnp.ndarray, global_step: int = 0) -> jnp.ndarray:
        if waveform.ndim == 3:  # (B, 1, L) -> (B, L)
            waveform = jnp.squeeze(waveform, axis=1)
        orig_dtype = waveform.dtype
        waveform = waveform.astype(jnp.float32)

        B, L = waveform.shape
        N = self.fft_size
        hop = self.hop_size
        half = N // 2
        F = half + 1
        assert L > half, "reflect padding (torch.stft center=True) needs L > fft_size//2"

        # torch.stft(center=True, pad_mode='reflect'): pad N//2 on both sides.
        padded = jnp.pad(waveform, ((0, 0), (half, half)), mode="reflect")
        T = 1 + L // hop  # number of frames

        # Adaptive frame tiling: keep Tpad - T small (< ~8 * n_tiles garbage
        # frames) and force >= 2 tiles for B == 1 so v7x's two TCs both work.
        n_tiles = max(1, -(-T // self.frame_tile))
        if B == 1 and n_tiles == 1 and T > 8:
            n_tiles = 2
        tT = _round_up(-(-T // n_tiles), 8)
        Tpad = n_tiles * tT

        # Row decomposition of the frames.  With hop | N each frame is the
        # concatenation of R = N/hop consecutive hop-wide rows of the padded
        # waveform, so the kernel only needs ~1.01x of the input in HBM.
        if N % hop == 0:
            row_w = hop
        else:
            row_w = N   # TODO(synk): general hop would need a gcd-based row split
        R = N // row_w
        win_rows = tT + R - 1
        n_rows = (n_tiles - 1) * tT + win_rows   # == Tpad + R - 1

        if row_w == hop:
            total = n_rows * hop
            cur = padded.shape[1]
            if cur < total:
                padded = jnp.pad(padded, ((0, 0), (0, total - cur)))
            elif cur > total:
                padded = padded[:, :total]       # tail never used by frames < Tpad
            rows = padded.reshape(B, n_rows, hop)
            # Per-tile row windows (tiles overlap by R-1 rows -> ~0.3% duplication).
            row_idx = (jnp.arange(n_tiles) * tT)[:, None] + jnp.arange(win_rows)[None, :]
            rows_tiled = rows[:, row_idx, :]                 # (B, n_tiles, win_rows, hop)
        else:
            # Fallback: full-frame gather (N/hop x duplication), R == 1.
            need = (Tpad - 1) * hop + N
            if need > padded.shape[1]:
                padded = jnp.pad(padded, ((0, 0), (0, need - padded.shape[1])))
            starts = jnp.arange(Tpad) * hop
            idx = starts[:, None] + jnp.arange(N)[None, :]
            frames = padded[:, idx]                          # (B, Tpad, N)
            rows_tiled = frames.reshape(B, n_tiles, tT, N)

        # Cast to the caller's dtype inside the kernel (halves bf16/f16 writeback).
        out_dtype = orig_dtype if orig_dtype in (
            jnp.dtype(jnp.float32), jnp.dtype(jnp.bfloat16), jnp.dtype(jnp.float16)
        ) else jnp.dtype(jnp.float32)

        out = pl.pallas_call(
            _stft_mag_kernel,
            out_shape=jax.ShapeDtypeStruct((B, Tpad, F), out_dtype),
            grid_spec=pltpu.PrefetchScalarGridSpec(
                num_scalar_prefetch=0,
                grid=(B, n_tiles),
                in_specs=[
                    # Batch / tile dims squeezed -> kernel refs are 2-D.
                    pl.BlockSpec((None, None, win_rows, row_w),
                                 lambda b, t: (b, t, 0, 0)),
                    # Constant basis blocks: same block every step, fetched once.
                    pl.BlockSpec((N, N), lambda b, t: (0, 0)),
                    pl.BlockSpec((N, N), lambda b, t: (0, 0)),
                ],
                out_specs=pl.BlockSpec((None, tT, F), lambda b, t: (b, t, 0)),
            ),
            compiler_params=pltpu.CompilerParams(
                dimension_semantics=("parallel", "parallel"),
                vmem_limit_bytes=48 * 1024 * 1024,   # v5e scoped default is only 16 MiB
            ),
        )(rows_tiled, self.basis_hi, self.basis_lo)

        out = out[:, :T, :]                               # drop frame padding
        if out.dtype != orig_dtype:
            out = out.astype(orig_dtype)
        # (B, T, F) -> (B, 1, T, F), same as .transpose(2,1).unsqueeze(1)
        return out[:, None, :, :]


def _reference(module: SpectrogramTransform, waveform: jnp.ndarray) -> jnp.ndarray:
    """Pure-JAX reference (rFFT) for sanity checking."""
    if waveform.ndim == 3:
        waveform = jnp.squeeze(waveform, axis=1)
    waveform = waveform.astype(jnp.float32)
    N, hop = module.fft_size, module.hop_size
    padded = jnp.pad(waveform, ((0, 0), (N // 2, N // 2)), mode="reflect")
    T = 1 + waveform.shape[1] // hop
    starts = jnp.arange(T) * hop
    idx = starts[:, None] + jnp.arange(N)[None, :]
    frames = padded[:, idx] * module.window[None, None, :]
    spec = jnp.fft.rfft(frames, n=N, axis=-1)
    power = jnp.maximum(spec.real ** 2 + spec.imag ** 2, 1e-7)
    return jnp.sqrt(power)[:, None, :, :]


if __name__ == "__main__":
    # Small, fast shapes (same structure as defaults 1024/256/800; hop | fft).
    fft_size, hop_size, win_size = 128, 32, 96
    B, L = 2, 256  # -> 9 frames, 65 freq bins

    key = jax.random.PRNGKey(0)
    waveform = jax.random.normal(key, (B, 1, L), dtype=jnp.float32)

    module = SpectrogramTransform(fft_size, hop_size, win_size)
    out = module(waveform, global_step=0)
    out = jax.block_until_ready(out)

    T = 1 + L // hop_size
    F = fft_size // 2 + 1
    assert out.shape == (B, 1, T, F), out.shape

    ref = _reference(module, waveform)
    np.testing.assert_allclose(np.asarray(out), np.asarray(ref), rtol=1e-4, atol=1e-4)

    print("KERNEL_OK")
</pallas_src>

<mosaic_0001>
module attributes {stable_mosaic.version = 11 : i64} {
  func.func @_stft_mag_kernel(%arg0: i32, %arg1: i32, %arg2: memref<1x1x19x32xf32, #tpu.memory_space<vmem>>, %arg3: memref<128x128xbf16, #tpu.memory_space<vmem>>, %arg4: memref<128x128xbf16, #tpu.memory_space<vmem>>, %arg5: memref<1x16x65xf32, #tpu.memory_space<vmem>>) attributes {dimension_semantics = [#tpu.dimension_semantics<parallel>, #tpu.dimension_semantics<parallel>], iteration_bounds = array<i64: 2, 1>, scalar_prefetch = 0 : i64, scratch_operands = 0 : i64, tpu.core_type = #tpu.core_type<tc>, window_params = [{transform_indices = @transform_0, window_bounds = array<i64: 1, 1, 19, 32>}, {pipeline_mode = #tpu.pipeline_mode<synchronous>, transform_indices = @transform_1, window_bounds = array<i64: 128, 128>}, {pipeline_mode = #tpu.pipeline_mode<synchronous>, transform_indices = @transform_2, window_bounds = array<i64: 128, 128>}, {transform_indices = @transform_3, window_bounds = array<i64: 1, 16, 65>}]} {
    %cst = arith.constant 0.000000e+00 : f32
    %0 = vector.broadcast %cst : f32 to vector<16x128xf32>
    %c0 = arith.constant 0 : index
    %c0_0 = arith.constant 0 : index
    %c0_1 = arith.constant 0 : index
    %c0_2 = arith.constant 0 : index
    %1 = vector.load %arg2[%c0, %c0_0, %c0_1, %c0_2] : memref<1x1x19x32xf32, #tpu.memory_space<vmem>>, vector<1x1x16x32xf32>
    %2 = vector.shape_cast %1 : vector<1x1x16x32xf32> to vector<16x32xf32>
    %3 = arith.truncf %2 : vector<16x32xf32> to vector<16x32xbf16>
    %4 = arith.extf %3 : vector<16x32xbf16> to vector<16x32xf32>
    %5 = arith.subf %2, %4 : vector<16x32xf32>
    %6 = arith.truncf %5 : vector<16x32xf32> to vector<16x32xbf16>
    %c0_3 = arith.constant 0 : index
    %c0_4 = arith.constant 0 : index
    %7 = vector.load %arg3[%c0_3, %c0_4] : memref<128x128xbf16, #tpu.memory_space<vmem>>, vector<32x128xbf16>
    %c0_5 = arith.constant 0 : index
    %c0_6 = arith.constant 0 : index
    %8 = vector.load %arg4[%c0_5, %c0_6] : memref<128x128xbf16, #tpu.memory_space<vmem>>, vector<32x128xbf16>
    %cst_7 = arith.constant dense<0.000000e+00> : vector<16x128xf32>
    %9 = tpu.matmul %3, %7, %cst_7 {dimension_numbers = #tpu.dot_dimension_numbers<[1], [0], [0], [1], [0, 0, 1, 1], [], []>} : vector<16x32xbf16>, vector<32x128xbf16>, vector<16x128xf32> -> vector<16x128xf32>
    %10 = arith.addf %0, %9 : vector<16x128xf32>
    %cst_8 = arith.constant dense<0.000000e+00> : vector<16x128xf32>
    %11 = tpu.matmul %3, %8, %cst_8 {dimension_numbers = #tpu.dot_dimension_numbers<[1], [0], [0], [1], [0, 0, 1, 1], [], []>} : vector<16x32xbf16>, vector<32x128xbf16>, vector<16x128xf32> -> vector<16x128xf32>
    %12 = arith.addf %10, %11 : vector<16x128xf32>
    %cst_9 = arith.constant dense<0.000000e+00> : vector<16x128xf32>
    %13 = tpu.matmul %6, %7, %cst_9 {dimension_numbers = #tpu.dot_dimension_numbers<[1], [0], [0], [1], [0, 0, 1, 1], [], []>} : vector<16x32xbf16>, vector<32x128xbf16>, vector<16x128xf32> -> vector<16x128xf32>
    %14 = arith.addf %12, %13 : vector<16x128xf32>
    %c0_10 = arith.constant 0 : index
    %c0_11 = arith.constant 0 : index
    %c1 = arith.constant 1 : index
    %c0_12 = arith.constant 0 : index
    %15 = vector.load %arg2[%c0_10, %c0_11, %c1, %c0_12] : memref<1x1x19x32xf32, #tpu.memory_space<vmem>>, vector<1x1x16x32xf32>
    %16 = vector.shape_cast %15 : vector<1x1x16x32xf32> to vector<16x32xf32>
    %17 = arith.truncf %16 : vector<16x32xf32> to vector<16x32xbf16>
    %18 = arith.extf %17 : vector<16x32xbf16> to vector<16x32xf32>
    %19 = arith.subf %16, %18 : vector<16x32xf32>
    %20 = arith.truncf %19 : vector<16x32xf32> to vector<16x32xbf16>
    %c32 = arith.constant 32 : index
    %c0_13 = arith.constant 0 : index
    %21 = vector.load %arg3[%c32, %c0_13] : memref<128x128xbf16, #tpu.memory_space<vmem>>, vector<32x128xbf16>
    %c32_14 = arith.constant 32 : index
    %c0_15 = arith.constant 0 : index
    %22 = vector.load %arg4[%c32_14, %c0_15] : memref<128x128xbf16, #tpu.memory_space<vmem>>, vector<32x128xbf16>
    %cst_16 = arith.constant dense<0.000000e+00> : vector<16x128xf32>
    %23 = tpu.matmul %17, %21, %cst_16 {dimension_numbers = #tpu.dot_dimension_numbers<[1], [0], [0], [1], [0, 0, 1, 1], [], []>} : vector<16x32xbf16>, vector<32x128xbf16>, vector<16x128xf32> -> vector<16x128xf32>
    %24 = arith.addf %14, %23 : vector<16x128xf32>
    %cst_17 = arith.constant dense<0.000000e+00> : vector<16x128xf32>
    %25 = tpu.matmul %17, %22, %cst_17 {dimension_numbers = #tpu.dot_dimension_numbers<[1], [0], [0], [1], [0, 0, 1, 1], [], []>} : vector<16x32xbf16>, vector<32x128xbf16>, vector<16x128xf32> -> vector<16x128xf32>
    %26 = arith.addf %24, %25 : vector<16x128xf32>
    %cst_18 = arith.constant dense<0.000000e+00> : vector<16x128xf32>
    %27 = tpu.matmul %20, %21, %cst_18 {dimension_numbers = #tpu.dot_dimension_numbers<[1], [0], [0], [1], [0, 0, 1, 1], [], []>} : vector<16x32xbf16>, vector<32x128xbf16>, vector<16x128xf32> -> vector<16x128xf32>
    %28 = arith.addf %26, %27 : vector<16x128xf32>
    %c0_19 = arith.constant 0 : index
    %c0_20 = arith.constant 0 : index
    %c2 = arith.constant 2 : index
    %c0_21 = arith.constant 0 : index
    %29 = vector.load %arg2[%c0_19, %c0_20, %c2, %c0_21] : memref<1x1x19x32xf32, #tpu.memory_space<vmem>>, vector<1x1x16x32xf32>
    %30 = vector.shape_cast %29 : vector<1x1x16x32xf32> to vector<16x32xf32>
    %31 = arith.truncf %30 : vector<16x32xf32> to vector<16x32xbf16>
    %32 = arith.extf %31 : vector<16x32xbf16> to vector<16x32xf32>
    %33 = arith.subf %30, %32 : vector<16x32xf32>
    %34 = arith.truncf %33 : vector<16x32xf32> to vector<16x32xbf16>
    %c64 = arith.constant 64 : index
    %c0_22 = arith.constant 0 : index
    %35 = vector.load %arg3[%c64, %c0_22] : memref<128x128xbf16, #tpu.memory_space<vmem>>, vector<32x128xbf16>
    %c64_23 = arith.constant 64 : index
    %c0_24 = arith.constant 0 : index
    %36 = vector.load %arg4[%c64_23, %c0_24] : memref<128x128xbf16, #tpu.memory_space<vmem>>, vector<32x128xbf16>
    %cst_25 = arith.constant dense<0.000000e+00> : vector<16x128xf32>
    %37 = tpu.matmul %31, %35, %cst_25 {dimension_numbers = #tpu.dot_dimension_numbers<[1], [0], [0], [1], [0, 0, 1, 1], [], []>} : vector<16x32xbf16>, vector<32x128xbf16>, vector<16x128xf32> -> vector<16x128xf32>
    %38 = arith.addf %28, %37 : vector<16x128xf32>
    %cst_26 = arith.constant dense<0.000000e+00> : vector<16x128xf32>
    %39 = tpu.matmul %31, %36, %cst_26 {dimension_numbers = #tpu.dot_dimension_numbers<[1], [0], [0], [1], [0, 0, 1, 1], [], []>} : vector<16x32xbf16>, vector<32x128xbf16>, vector<16x128xf32> -> vector<16x128xf32>
    %40 = arith.addf %38, %39 : vector<16x128xf32>
    %cst_27 = arith.constant dense<0.000000e+00> : vector<16x128xf32>
    %41 = tpu.matmul %34, %35, %cst_27 {dimension_numbers = #tpu.dot_dimension_numbers<[1], [0], [0], [1], [0, 0, 1, 1], [], []>} : vector<16x32xbf16>, vector<32x128xbf16>, vector<16x128xf32> -> vector<16x128xf32>
    %42 = arith.addf %40, %41 : vector<16x128xf32>
    %c0_28 = arith.constant 0 : index
    %c0_29 = arith.constant 0 : index
    %c3 = arith.constant 3 : index
    %c0_30 = arith.constant 0 : index
    %43 = vector.load %arg2[%c0_28, %c0_29, %c3, %c0_30] : memref<1x1x19x32xf32, #tpu.memory_space<vmem>>, vector<1x1x16x32xf32>
    %44 = vector.shape_cast %43 : vector<1x1x16x32xf32> to vector<16x32xf32>
    %45 = arith.truncf %44 : vector<16x32xf32> to vector<16x32xbf16>
    %46 = arith.extf %45 : vector<16x32xbf16> to vector<16x32xf32>
    %47 = arith.subf %44, %46 : vector<16x32xf32>
    %48 = arith.truncf %47 : vector<16x32xf32> to vector<16x32xbf16>
    %c96 = arith.constant 96 : index
    %c0_31 = arith.constant 0 : index
    %49 = vector.load %arg3[%c96, %c0_31] : memref<128x128xbf16, #tpu.memory_space<vmem>>, vector<32x128xbf16>
    %c96_32 = arith.constant 96 : index
    %c0_33 = arith.constant 0 : index
    %50 = vector.load %arg4[%c96_32, %c0_33] : memref<128x128xbf16, #tpu.memory_space<vmem>>, vector<32x128xbf16>
    %cst_34 = arith.constant dense<0.000000e+00> : vector<16x128xf32>
    %51 = tpu.matmul %45, %49, %cst_34 {dimension_numbers = #tpu.dot_dimension_numbers<[1], [0], [0], [1], [0, 0, 1, 1], [], []>} : vector<16x32xbf16>, vector<32x128xbf16>, vector<16x128xf32> -> vector<16x128xf32>
    %52 = arith.addf %42, %51 : vector<16x128xf32>
    %cst_35 = arith.constant dense<0.000000e+00> : vector<16x128xf32>
    %53 = tpu.matmul %45, %50, %cst_35 {dimension_numbers = #tpu.dot_dimension_numbers<[1], [0], [0], [1], [0, 0, 1, 1], [], []>} : vector<16x32xbf16>, vector<32x128xbf16>, vector<16x128xf32> -> vector<16x128xf32>
    %54 = arith.addf %52, %53 : vector<16x128xf32>
    %cst_36 = arith.constant dense<0.000000e+00> : vector<16x128xf32>
    %55 = tpu.matmul %48, %49, %cst_36 {dimension_numbers = #tpu.dot_dimension_numbers<[1], [0], [0], [1], [0, 0, 1, 1], [], []>} : vector<16x32xbf16>, vector<32x128xbf16>, vector<16x128xf32> -> vector<16x128xf32>
    %56 = arith.addf %54, %55 : vector<16x128xf32>
    %57 = vector.extract_strided_slice %56 {offsets = [0, 0], sizes = [16, 64], strides = [1, 1]} : vector<16x128xf32> to vector<16x64xf32>
    %58 = vector.extract_strided_slice %56 {offsets = [0, 64], sizes = [16, 64], strides = [1, 1]} : vector<16x128xf32> to vector<16x64xf32>
    %59 = tpu.iota {dimensions = array<i32: 1>} : vector<16x64xi32>
    %60 = arith.mulf %57, %57 : vector<16x64xf32>
    %c0_i32 = arith.constant 0 : i32
    %61 = vector.broadcast %c0_i32 : i32 to vector<16x64xi32>
    %62 = arith.cmpi eq, %59, %61 : vector<16x64xi32>
    %63 = arith.mulf %58, %58 : vector<16x64xf32>
    %cst_37 = arith.constant 0.000000e+00 : f32
    %64 = vector.broadcast %cst_37 : f32 to vector<16x64xf32>
    %65 = arith.select %62, %64, %63 : vector<16x64xi1>, vector<16x64xf32>
    %66 = arith.addf %60, %65 : vector<16x64xf32>
    %cst_38 = arith.constant 1.000000e-07 : f32
    %67 = vector.broadcast %cst_38 : f32 to vector<16x64xf32>
    %68 = arith.maximumf %66, %67 : vector<16x64xf32>
    %69 = math.sqrt %68 : vector<16x64xf32>
    %c0_39 = arith.constant 0 : index
    %c0_40 = arith.constant 0 : index
    %c0_41 = arith.constant 0 : index
    %70 = vector.load %arg5[%c0_39, %c0_40, %c0_41] : memref<1x16x65xf32, #tpu.memory_space<vmem>>, vector<1x16x64xf32>
    %71 = vector.shape_cast %70 : vector<1x16x64xf32> to vector<16x64xf32>
    %72 = vector.shape_cast %69 : vector<16x64xf32> to vector<1x16x64xf32>
    tpu.vector_store %arg5[%c0_39, %c0_40, %c0_41], %72 {strides = array<i32>} : memref<1x16x65xf32, #tpu.memory_space<vmem>>, vector<1x16x64xf32>,
    %73 = vector.extract_strided_slice %58 {offsets = [0, 0], sizes = [16, 1], strides = [1, 1]} : vector<16x64xf32> to vector<16x1xf32>
    %74 = arith.mulf %73, %73 : vector<16x1xf32>
    %cst_42 = arith.constant 1.000000e-07 : f32
    %75 = vector.broadcast %cst_42 : f32 to vector<16x1xf32>
    %76 = arith.maximumf %74, %75 : vector<16x1xf32>
    %77 = math.sqrt %76 : vector<16x1xf32>
    %c0_43 = arith.constant 0 : index
    %c0_44 = arith.constant 0 : index
    %c64_45 = arith.constant 64 : index
    %78 = vector.load %arg5[%c0_43, %c0_44, %c64_45] : memref<1x16x65xf32, #tpu.memory_space<vmem>>, vector<1x16x1xf32>
    %79 = vector.shape_cast %78 : vector<1x16x1xf32> to vector<16x1xf32>
    %80 = vector.shape_cast %77 : vector<16x1xf32> to vector<1x16x1xf32>
    tpu.vector_store %arg5[%c0_43, %c0_44, %c64_45], %80 {strides = array<i32>} : memref<1x16x65xf32, #tpu.memory_space<vmem>>, vector<1x16x1xf32>,
    return
  }
  func.func @transform_0(%arg0: i32, %arg1: i32) -> (i32, i32, i32, i32) {
    %c0_i32 = arith.constant 0 : i32
    %c0_i32_0 = arith.constant 0 : i32
    %c0_i32_1 = arith.constant 0 : i32
    return %arg0, %arg1, %c0_i32, %c0_i32_0 : i32, i32, i32, i32
  }
  func.func @transform_1(%arg0: i32, %arg1: i32) -> (i32, i32) {
    %c0_i32 = arith.constant 0 : i32
    %c0_i32_0 = arith.constant 0 : i32
    %c0_i32_1 = arith.constant 0 : i32
    return %c0_i32, %c0_i32_0 : i32, i32
  }
  func.func @transform_2(%arg0: i32, %arg1: i32) -> (i32, i32) {
    %c0_i32 = arith.constant 0 : i32
    %c0_i32_0 = arith.constant 0 : i32
    %c0_i32_1 = arith.constant 0 : i32
    return %c0_i32, %c0_i32_0 : i32, i32
  }
  func.func @transform_3(%arg0: i32, %arg1: i32) -> (i32, i32, i32) {
    %c0_i32 = arith.constant 0 : i32
    %c0_i32_0 = arith.constant 0 : i32
    return %arg0, %arg1, %c0_i32 : i32, i32, i32
  }
}

</mosaic_0001>

<llo_original>
// kernel: a_call__.1
$region0: #{a_call__.1}
  #allocation0 [shape = 'u32[]', space=smem, size = 0x4, offset = 0x4, fixed_abs, tag = 'smem constant byte address 0x4 - core index']
  #allocation1 [shape = 'u32[144,128]{1,0:T(1,128)}', space=vmem, size = 0x12000, scoped, tag = 'internal scratch']
  %s0 = inlined_call_operand.vmem [shape: f32[2,1,19,32], index: 0, kind: input, shape index: {}]
  %s1 = inlined_call_operand.vmem [shape: bf16[128,128], index: 1, kind: input, shape index: {}]
  %s2 = inlined_call_operand.vmem [shape: bf16[128,128], index: 2, kind: input, shape index: {}]
  %s3 = inlined_call_operand.vmem [shape: f32[2,16,65], index: 3, kind: output, shape index: {}]
  %s4 = sld [smem:[#allocation0]]
  $region45: #{a_call__.1} parent=0
    _
  %s6 = ssub.s32 1, %s4
  %s7 = scalar_select 0, %s6, %s4
  loop: start=0, step=1, limit=4
  $region2: #{a_call__.1} parent=0 // loop_pre_header
    _
  $region3: #{a_call__.1} parent=0 // loop_header
    %s9 = sphi 0, %s13
    %p10 = scmp.ge.s32.totalorder %s9, 4
    %s16 = sphi 0, %s28
    %s17 = sphi 0, %s24
    %s18 = sphi 0, %s16
    %s19 = sphi 0, %s17
    %s20 = sphi 0, %s18
    %s21 = sphi 0, %s19
    %s33 = sphi 0, %s35
    %s36 = sphi 0, %s33
    %s37 = sphi 0, %s36
    %s53 = sphi 0, %s37
    %s57 = sphi 0, %s57
    %s59 = sphi 0, %s57
    %s60 = sphi 0, %s59
    %s74 = sphi 0, %s60
    %s78 = sphi 0, %s78
    %s80 = sphi 0, %s78
    %s81 = sphi 0, %s80
    %s95 = sphi 0, %s81
    %s103 = sphi 0, %s105
    %s106 = sphi 0, %s103
    %s107 = sphi 0, %s106
    %s123 = sphi 0, %s107
  $region4: #{a_call__.1} parent=0 // loop_header_branch
    %12 = sbr.rel (%p10) target = $region8
  $region5: #{a_call__.1} parent=0 // loop_body
    %s14 = ssub.s32 %s9, 1
    %s15 = ssub.s32 %s9, 2
    %s22 = sadd.s32 1, %s17
    %p23 = scmp.ge.s32.totalorder %s22, 1
    %s24 = scalar_select %p23, 0, %s22
    %s25 = sadd.s32 1, %s16
    %s26 = scalar_select %p23, %s25, %s16
    %p27 = scmp.ge.s32.totalorder %s26, 2
    %s28 = scalar_select %p27, 0, %s26
    %s29 = ssub.s32 %s16, %s28
    %s30 = ssub.s32 %s17, %s24
    %s31 = sor.u32 %s29, %s30
    %p32 = scmp.eq.s32.totalorder %s31, 0
    %s34 = sadd.s32 %s33, 1
    %s35 = scalar_select %p32, %s33, %s34
    %p38 = pneg %p32
    %p39 = scmp.eq.s32.totalorder %s9, 1
    %p40 = por %p38, %p39
    %p41 = scmp.ne.s32.totalorder %s33, %s36
    %p42 = scmp.eq.s32.totalorder %s9, 0
    %p43 = por %p41, %p42
    %p44 = scmp.ne.s32.totalorder %s33, %s36
    %p45 = scmp.eq.s32.totalorder %s14, 1
    %p46 = por %p44, %p45
    %p47 = scmp.ne.s32.totalorder %s36, %s37
    %p48 = scmp.eq.s32.totalorder %s14, 0
    %p49 = por %p47, %p48
    %p50 = scmp.ne.s32.totalorder %s36, %s37
    %p51 = scmp.eq.s32.totalorder %s15, 1
    %p52 = por %p50, %p51
    %p54 = scmp.ne.s32.totalorder %s37, %s53
    %p55 = scmp.eq.s32.totalorder %s15, 0
    %p56 = por %p54, %p55
    %s58 = sadd.s32 %s57, 1
    %p61 = scmp.eq.s32.totalorder %s9, 1
    %p62 = scmp.ne.s32.totalorder %s57, %s59
    %p63 = scmp.eq.s32.totalorder %s9, 0
    %p64 = por %p62, %p63
    %p65 = scmp.ne.s32.totalorder %s57, %s59
    %p66 = scmp.eq.s32.totalorder %s14, 1
    %p67 = por %p65, %p66
    %p68 = scmp.ne.s32.totalorder %s59, %s60
    %p69 = scmp.eq.s32.totalorder %s14, 0
    %p70 = por %p68, %p69
    %p71 = scmp.ne.s32.totalorder %s59, %s60
    %p72 = scmp.eq.s32.totalorder %s15, 1
    %p73 = por %p71, %p72
    %p75 = scmp.ne.s32.totalorder %s60, %s74
    %p76 = scmp.eq.s32.totalorder %s15, 0
    %p77 = por %p75, %p76
    %s79 = sadd.s32 %s78, 1
    %p82 = scmp.eq.s32.totalorder %s9, 1
    %p83 = scmp.ne.s32.totalorder %s78, %s80
    %p84 = scmp.eq.s32.totalorder %s9, 0
    %p85 = por %p83, %p84
    %p86 = scmp.ne.s32.totalorder %s78, %s80
    %p87 = scmp.eq.s32.totalorder %s14, 1
    %p88 = por %p86, %p87
    %p89 = scmp.ne.s32.totalorder %s80, %s81
    %p90 = scmp.eq.s32.totalorder %s14, 0
    %p91 = por %p89, %p90
    %p92 = scmp.ne.s32.totalorder %s80, %s81
    %p93 = scmp.eq.s32.totalorder %s15, 1
    %p94 = por %p92, %p93
    %p96 = scmp.ne.s32.totalorder %s81, %s95
    %p97 = scmp.eq.s32.totalorder %s15, 0
    %p98 = por %p96, %p97
    %s99 = ssub.s32 %s16, %s28
    %s100 = ssub.s32 %s17, %s24
    %s101 = sor.u32 %s99, %s100
    %p102 = scmp.eq.s32.totalorder %s101, 0
    %s104 = sadd.s32 %s103, 1
    %s105 = scalar_select %p102, %s103, %s104
    %p108 = pneg %p102
    %p109 = scmp.eq.s32.totalorder %s9, 1
    %p110 = por %p108, %p109
    %p111 = scmp.ne.s32.totalorder %s103, %s106
    %p112 = scmp.eq.s32.totalorder %s9, 0
    %p113 = por %p111, %p112
    %p114 = scmp.ne.s32.totalorder %s103, %s106
    %p115 = scmp.eq.s32.totalorder %s14, 1
    %p116 = por %p114, %p115
    %p117 = scmp.ne.s32.totalorder %s106, %s107
    %p118 = scmp.eq.s32.totalorder %s14, 0
    %p119 = por %p117, %p118
    %p120 = scmp.ne.s32.totalorder %s106, %s107
    %p121 = scmp.eq.s32.totalorder %s15, 1
    %p122 = por %p120, %p121
    %p124 = scmp.ne.s32.totalorder %s107, %s123
    %p125 = scmp.eq.s32.totalorder %s15, 0
    %p126 = por %p124, %p125
    %p127 = scmp.le.s32.totalorder 1, %s9
    %p128 = scmp.lt.s32.totalorder %s9, 3
    %p129 = pnand %p127, %p128
    %p130 = pneg %p129
    // Predicated region
    $region9: #{a_call__.1} parent=5 // pred_check
      _
    $region10: #{a_call__.1} parent=5 // pred_check_branch
      %132 = sbr.rel (%p129) target = $region12
    $region11: #{a_call__.1} parent=5 // pred_region
      %s133 = ssub.s32 %s9, 1
      // Predicated region
      $region13: #{a_call__.1} parent=11 // pred_check
        %p134 = pneg %p70
      $region14: #{a_call__.1} parent=11 // pred_check_branch
        %136 = sbr.rel (%p134) target = $region16
      $region15: #{a_call__.1} parent=11 // pred_region
        _
      $region16: #{a_call__.1} parent=11 // pred_fallthru
        _
      // Predicated region
      $region17: #{a_call__.1} parent=11 // pred_check
        %p137 = pneg %p91
      $region18: #{a_call__.1} parent=11 // pred_check_branch
        %139 = sbr.rel (%p137) target = $region20
      $region19: #{a_call__.1} parent=11 // pred_region
        _
      $region20: #{a_call__.1} parent=11 // pred_fallthru
        _
    $region12: #{a_call__.1} parent=5 // pred_fallthru
      _
    %p140 = scmp.lt.s32.totalorder %s9, 2
    // Predicated region
    $region21: #{a_call__.1} parent=5 // pred_check
      %p141 = pneg %p140
    $region22: #{a_call__.1} parent=5 // pred_check_branch
      %143 = sbr.rel (%p141) target = $region24
    $region23: #{a_call__.1} parent=5 // pred_region
      // Predicated region
      $region25: #{a_call__.1} parent=23 // pred_check
        %p144 = pneg %p43
      $region26: #{a_call__.1} parent=23 // pred_check_branch
        %146 = sbr.rel (%p144) target = $region28
      $region27: #{a_call__.1} parent=23 // pred_region
        %p147 = scmp.lt.s32.totalorder %s16, 1
        %s148 = scalar_select %p147, %s16, 1
        %p149 = scmp.lt.s32.totalorder %s17, 0
        %s150 = scalar_select %p149, %s17, 0
        %s151 = smul.addr %s150, 3
        %s152 = smul.addr %s148, 3
        %s153 = sadd.s32 %s151, %s152
        %s154 = smul.addr %s153, 8
        %s155 = scalar_lea.vmem %s0, %s154
      $region28: #{a_call__.1} parent=23 // pred_fallthru
        _
    $region24: #{a_call__.1} parent=5 // pred_fallthru
      _
    %p156 = scmp.le.s32.totalorder 1, %s9
    %p157 = scmp.lt.s32.totalorder %s9, 3
    %p158 = pnand %p156, %p157
    %p159 = pneg %p158
    // Predicated region
    $region29: #{a_call__.1} parent=5 // pred_check
      _
    $region30: #{a_call__.1} parent=5 // pred_check_branch
      %161 = sbr.rel (%p158) target = $region32
    $region31: #{a_call__.1} parent=5 // pred_region
      %s162 = ssub.s32 %s9, 1
      %p163 = scmp.lt.s32.totalorder %s18, 1
      %s164 = scalar_select %p163, %s18, 1
      %p165 = scmp.lt.s32.totalorder %s19, 0
      %s166 = scalar_select %p165, %s19, 0
      %s167 = smul.addr %s166, 3
      %s168 = smul.addr %s164, 3
      %s169 = sadd.s32 %s167, %s168
      %s170 = smul.addr %s169, 8
      %s171 = scalar_lea.vmem %s0, %s170
      %p172 = pneg %p49
      %p173 = pneg %p46
      %p174 = pneg %p70
      %p175 = pneg %p67
      %p176 = pneg %p91
      %p177 = pneg %p88
      %p178 = pneg %p119
      %p179 = pneg %p116
      %s180 = smul.u32 2, %s19
      %p181 = scmp.lt.s32.totalorder %s18, 1
      %s182 = scalar_select %p181, %s18, 1
      %p183 = scmp.lt.s32.totalorder %s180, 1
      %s184 = scalar_select %p183, %s180, 1
      %s185 = smul.addr %s182, 2
      %s186 = sadd.s32 %s184, %s185
      %s187 = smul.addr %s186, 8
      %s188 = scalar_lea.vmem %s3, %s187
      %p189 = scmp.lt.s32.totalorder %s18, 1
      %s190 = scalar_select %p189, %s18, 1
      %p191 = scmp.lt.s32.totalorder %s19, 0
      %s192 = scalar_select %p191, %s19, 0
      %s193 = smul.addr %s192, 3
      %s194 = smul.addr %s190, 3
      %s195 = sadd.s32 %s193, %s194
      %s196 = smul.addr %s195, 8
      %s197 = scalar_lea.vmem %s0, %s196
      %s198 = smul.u32 2, %s19
      %p199 = scmp.lt.s32.totalorder %s18, 1
      %s200 = scalar_select %p199, %s18, 1
      %p201 = scmp.lt.s32.totalorder %s198, 1
      %s202 = scalar_select %p201, %s198, 1
      %s203 = smul.addr %s200, 2
      %s204 = sadd.s32 %s202, %s203
      %s205 = smul.addr %s204, 8
      %s206 = scalar_lea.vmem %s3, %s205
      %s207 = smul.u32 2, %s19
      %v209 = vld [vmem:[%s197] sm:$0xff]
      %v210 = vld [vmem:[%s197 + $0x8] sm:$0xff]
      %v211 = vpack.c.bf16 %v210, %v209
      %v212 = vunpack.c.l.bf16 %v211
      %v213 = vunpack.c.h.bf16 %v211
      %v214 = vsub.f32 %v209, %v212
      %v215 = vsub.f32 %v210, %v213
      %v216 = vpack.c.bf16 %v215, %v214
      %v217 = vld [vmem:[%s1] sm:$0xf]
      %v218 = vld [vmem:[%s1 + $0x4] sm:$0xf]
      %v219 = vld [vmem:[%s1 + $0x8] sm:$0xf]
      %v220 = vld [vmem:[%s1 + $0xc] sm:$0xf]
      %v221 = vld [vmem:[%s2] sm:$0xf]
      %v222 = vld [vmem:[%s2 + $0x4] sm:$0xf]
      %v223 = vld [vmem:[%s2 + $0x8] sm:$0xf]
      %v224 = vld [vmem:[%s2 + $0xc] sm:$0xf]
      %v229 = vunpack.c.l.b16 %v221
      %v230 = vunpack.c.l.b16 %v222
      %v231 = vunpack.c.l.b16 %v223
      %v232 = vunpack.c.l.b16 %v224
      %v233 = vpack.c.b16 %v230, %v229
      %v234 = vpack.c.b16 %v232, %v231
      %vm237 = vcmask 261120
      %v239 = vsel %vm237, %v211, 0
      %241 = vmatprep.subr.bf16.mxu0 0
      %242 = vmatpush1.bf16.msra.mxu0 %v233
      %243 = vmatprep.subr.bf16.mxu0 0
      %244 = vmatpush1.bf16.msra.mxu0 %v234
      %245 = vmatprep.subr.bf16.mxu0 0
      %246 = vmatpush1.bf16.msra.mxu0 0
      %247 = vmatprep.subr.bf16.mxu0 0
      %248 = vmatpush1.bf16.msra.mxu0 0
      %249 = vmatprep.subr.bf16.mxu0 0
      %250 = vmatpush1.bf16.msra.mxu0 0
      %251 = vmatprep.subr.bf16.mxu0 0
      %252 = vmatpush1.bf16.msra.mxu0 0
      %253 = vmatprep.subr.bf16.mxu0 0
      %254 = vmatpush1.bf16.msra.mxu0 0
      %255 = vmatprep.subr.bf16.mxu0 0
      %256 = vmatpush1.bf16.msra.mxu0 0
      %257 = vmatprep.subr.bf16.mxu0 0
      %258 = vmatpush1.bf16.msra.mxu0 0
      %259 = vmatprep.subr.bf16.mxu0 0
      %260 = vmatpush1.bf16.msra.mxu0 0
      %261 = vmatprep.subr.bf16.mxu0 0
      %262 = vmatpush1.bf16.msra.mxu0 0
      %263 = vmatprep.subr.bf16.mxu0 0
      %264 = vmatpush1.bf16.msra.mxu0 0
      %265 = vmatprep.subr.bf16.mxu0 0
      %266 = vmatpush1.bf16.msra.mxu0 0
      %267 = vmatprep.subr.bf16.mxu0 0
      %268 = vmatpush1.bf16.msra.mxu0 0
      %269 = vmatprep.subr.bf16.mxu0 0
      %270 = vmatpush1.bf16.msra.mxu0 0
      %271 = vmatprep.subr.bf16.mxu0 0
      %272 = vmatpush1.bf16.msra.mxu0 0
      %273 = vmatprep.mubr.bf16.mxu0 0
      %274 = vmatmul.mubr.bf16.gmra.mrb[0].mxu0 %v239
      %v275 = vpop.f32.mrb[0].mxu0
      %v276 = vadd.f32 0.0, %v275
      %v277 = vpop.f32.mrb[0].mxu0
      %v278 = vpop.f32.mrb[0].mxu0
      %v279 = vadd.f32 0.0, %v278
      %v280 = vpop.f32.mrb[0].mxu0
      %281 = vdwg.mxu0
      %v286 = vunpack.c.l.b16 %v217
      %v287 = vunpack.c.l.b16 %v218
      %v288 = vunpack.c.l.b16 %v219
      %v289 = vunpack.c.l.b16 %v220
      %v290 = vpack.c.b16 %v287, %v286
      %v291 = vpack.c.b16 %v289, %v288
      %294 = vmatprep.subr.bf16.mxu0 0
      %295 = vmatpush1.bf16.msra.mxu0 %v290
      %296 = vmatprep.subr.bf16.mxu0 0
      %297 = vmatpush1.bf16.msra.mxu0 %v291
      %298 = vmatprep.subr.bf16.mxu0 0
      %299 = vmatpush1.bf16.msra.mxu0 0
      %300 = vmatprep.subr.bf16.mxu0 0
      %301 = vmatpush1.bf16.msra.mxu0 0
      %302 = vmatprep.subr.bf16.mxu0 0
      %303 = vmatpush1.bf16.msra.mxu0 0
      %304 = vmatprep.subr.bf16.mxu0 0
      %305 = vmatpush1.bf16.msra.mxu0 0
      %306 = vmatprep.subr.bf16.mxu0 0
      %307 = vmatpush1.bf16.msra.mxu0 0
      %308 = vmatprep.subr.bf16.mxu0 0
      %309 = vmatpush1.bf16.msra.mxu0 0
      %310 = vmatprep.subr.bf16.mxu0 0
      %311 = vmatpush1.bf16.msra.mxu0 0
      %312 = vmatprep.subr.bf16.mxu0 0
      %313 = vmatpush1.bf16.msra.mxu0 0
      %314 = vmatprep.subr.bf16.mxu0 0
      %315 = vmatpush1.bf16.msra.mxu0 0
      %316 = vmatprep.subr.bf16.mxu0 0
      %317 = vmatpush1.bf16.msra.mxu0 0
      %318 = vmatprep.subr.bf16.mxu0 0
      %319 = vmatpush1.bf16.msra.mxu0 0
      %320 = vmatprep.subr.bf16.mxu0 0
      %321 = vmatpush1.bf16.msra.mxu0 0
      %322 = vmatprep.subr.bf16.mxu0 0
      %323 = vmatpush1.bf16.msra.mxu0 0
      %324 = vmatprep.subr.bf16.mxu0 0
      %325 = vmatpush1.bf16.msra.mxu0 0
      %326 = vmatprep.mubr.bf16.mxu0 0
      %327 = vmatmul.mubr.bf16.gmra.mrb[0].mxu0 %v239
      %v328 = vpop.f32.mrb[0].mxu0
      %v329 = vadd.f32 %v276, %v328
      %v330 = vpop.f32.mrb[0].mxu0
      %v331 = vpop.f32.mrb[0].mxu0
      %v332 = vadd.f32 %v279, %v331
      %v333 = vpop.f32.mrb[0].mxu0
      %334 = vdwg.mxu0
      %v336 = vsel %vm237, %v216, 0
      %338 = vmatprep.subr.bf16.mxu0 0
      %339 = vmatpush1.bf16.msra.mxu0 %v290
      %340 = vmatprep.subr.bf16.mxu0 0
      %341 = vmatpush1.bf16.msra.mxu0 %v291
      %342 = vmatprep.subr.bf16.mxu0 0
      %343 = vmatpush1.bf16.msra.mxu0 0
      %344 = vmatprep.subr.bf16.mxu0 0
      %345 = vmatpush1.bf16.msra.mxu0 0
      %346 = vmatprep.subr.bf16.mxu0 0
      %347 = vmatpush1.bf16.msra.mxu0 0
      %348 = vmatprep.subr.bf16.mxu0 0
      %349 = vmatpush1.bf16.msra.mxu0 0
      %350 = vmatprep.subr.bf16.mxu0 0
      %351 = vmatpush1.bf16.msra.mxu0 0
      %352 = vmatprep.subr.bf16.mxu0 0
      %353 = vmatpush1.bf16.msra.mxu0 0
      %354 = vmatprep.subr.bf16.mxu0 0
      %355 = vmatpush1.bf16.msra.mxu0 0
      %356 = vmatprep.subr.bf16.mxu0 0
      %357 = vmatpush1.bf16.msra.mxu0 0
      %358 = vmatprep.subr.bf16.mxu0 0
      %359 = vmatpush1.bf16.msra.mxu0 0
      %360 = vmatprep.subr.bf16.mxu0 0
      %361 = vmatpush1.bf16.msra.mxu0 0
      %362 = vmatprep.subr.bf16.mxu0 0
      %363 = vmatpush1.bf16.msra.mxu0 0
      %364 = vmatprep.subr.bf16.mxu0 0
      %365 = vmatpush1.bf16.msra.mxu0 0
      %366 = vmatprep.subr.bf16.mxu0 0
      %367 = vmatpush1.bf16.msra.mxu0 0
      %368 = vmatprep.subr.bf16.mxu0 0
      %369 = vmatpush1.bf16.msra.mxu0 0
      %370 = vmatprep.mubr.bf16.mxu0 0
      %371 = vmatmul.mubr.bf16.gmra.mrb[0].mxu0 %v336
      %v372 = vpop.f32.mrb[0].mxu0
      %v373 = vadd.f32 0.0, %v372
      %v374 = vpop.f32.mrb[0].mxu0
      %v375 = vpop.f32.mrb[0].mxu0
      %v376 = vadd.f32 0.0, %v375
      %v377 = vpop.f32.mrb[0].mxu0
      %378 = vdwg.mxu0
      %v379 = vadd.f32 %v329, %v373
      %v380 = vadd.f32 %v332, %v376
      %v381 = vld [vmem:[%s197 + $0x1] sm:$0xff]
      %v382 = vld [vmem:[%s197 + $0x9] sm:$0xff]
      %v383 = vpack.c.bf16 %v382, %v381
      %v384 = vunpack.c.l.bf16 %v383
      %v385 = vunpack.c.h.bf16 %v383
      %v386 = vsub.f32 %v381, %v384
      %v387 = vsub.f32 %v382, %v385
      %v388 = vpack.c.bf16 %v387, %v386
      %v389 = vld [vmem:[%s1 + $0x10] sm:$0xf]
      %v390 = vld [vmem:[%s1 + $0x14] sm:$0xf]
      %v391 = vld [vmem:[%s1 + $0x18] sm:$0xf]
      %v392 = vld [vmem:[%s1 + $0x1c] sm:$0xf]
      %v393 = vld [vmem:[%s2 + $0x10] sm:$0xf]
      %v394 = vld [vmem:[%s2 + $0x14] sm:$0xf]
      %v395 = vld [vmem:[%s2 + $0x18] sm:$0xf]
      %v396 = vld [vmem:[%s2 + $0x1c] sm:$0xf]
      %v401 = vunpack.c.l.b16 %v389
      %v402 = vunpack.c.l.b16 %v390
      %v403 = vunpack.c.l.b16 %v391
      %v404 = vunpack.c.l.b16 %v392
      %v405 = vpack.c.b16 %v402, %v401
      %v406 = vpack.c.b16 %v404, %v403
      %v410 = vsel %vm237, %v383, 0
      %412 = vmatprep.subr.bf16.mxu0 0
      %413 = vmatpush1.bf16.msra.mxu0 %v405
      %414 = vmatprep.subr.bf16.mxu0 0
      %415 = vmatpush1.bf16.msra.mxu0 %v406
      %416 = vmatprep.subr.bf16.mxu0 0
      %417 = vmatpush1.bf16.msra.mxu0 0
      %418 = vmatprep.subr.bf16.mxu0 0
      %419 = vmatpush1.bf16.msra.mxu0 0
      %420 = vmatprep.subr.bf16.mxu0 0
      %421 = vmatpush1.bf16.msra.mxu0 0
      %422 = vmatprep.subr.bf16.mxu0 0
      %423 = vmatpush1.bf16.msra.mxu0 0
      %424 = vmatprep.subr.bf16.mxu0 0
      %425 = vmatpush1.bf16.msra.mxu0 0
      %426 = vmatprep.subr.bf16.mxu0 0
      %427 = vmatpush1.bf16.msra.mxu0 0
      %428 = vmatprep.subr.bf16.mxu0 0
      %429 = vmatpush1.bf16.msra.mxu0 0
      %430 = vmatprep.subr.bf16.mxu0 0
      %431 = vmatpush1.bf16.msra.mxu0 0
      %432 = vmatprep.subr.bf16.mxu0 0
      %433 = vmatpush1.bf16.msra.mxu0 0
      %434 = vmatprep.subr.bf16.mxu0 0
      %435 = vmatpush1.bf16.msra.mxu0 0
      %436 = vmatprep.subr.bf16.mxu0 0
      %437 = vmatpush1.bf16.msra.mxu0 0
      %438 = vmatprep.subr.bf16.mxu0 0
      %439 = vmatpush1.bf16.msra.mxu0 0
      %440 = vmatprep.subr.bf16.mxu0 0
      %441 = vmatpush1.bf16.msra.mxu0 0
      %442 = vmatprep.subr.bf16.mxu0 0
      %443 = vmatpush1.bf16.msra.mxu0 0
      %444 = vmatprep.mubr.bf16.mxu0 0
      %445 = vmatmul.mubr.bf16.gmra.mrb[0].mxu0 %v410
      %v446 = vpop.f32.mrb[0].mxu0
      %v447 = vadd.f32 0.0, %v446
      %v448 = vpop.f32.mrb[0].mxu0
      %v449 = vpop.f32.mrb[0].mxu0
      %v450 = vadd.f32 0.0, %v449
      %v451 = vpop.f32.mrb[0].mxu0
      %452 = vdwg.mxu0
      %v453 = vadd.f32 %v379, %v447
      %v454 = vadd.f32 %v380, %v450
      %v459 = vunpack.c.l.b16 %v393
      %v460 = vunpack.c.l.b16 %v394
      %v461 = vunpack.c.l.b16 %v395
      %v462 = vunpack.c.l.b16 %v396
      %v463 = vpack.c.b16 %v460, %v459
      %v464 = vpack.c.b16 %v462, %v461
      %467 = vmatprep.subr.bf16.mxu0 0
      %468 = vmatpush1.bf16.msra.mxu0 %v463
      %469 = vmatprep.subr.bf16.mxu0 0
      %470 = vmatpush1.bf16.msra.mxu0 %v464
      %471 = vmatprep.subr.bf16.mxu0 0
      %472 = vmatpush1.bf16.msra.mxu0 0
      %473 = vmatprep.subr.bf16.mxu0 0
      %474 = vmatpush1.bf16.msra.mxu0 0
      %475 = vmatprep.subr.bf16.mxu0 0
      %476 = vmatpush1.bf16.msra.mxu0 0
      %477 = vmatprep.subr.bf16.mxu0 0
      %478 = vmatpush1.bf16.msra.mxu0 0
      %479 = vmatprep.subr.bf16.mxu0 0
      %480 = vmatpush1.bf16.msra.mxu0 0
      %481 = vmatprep.subr.bf16.mxu0 0
      %482 = vmatpush1.bf16.msra.mxu0 0
      %483 = vmatprep.subr.bf16.mxu0 0
      %484 = vmatpush1.bf16.msra.mxu0 0
      %485 = vmatprep.subr.bf16.mxu0 0
      %486 = vmatpush1.bf16.msra.mxu0 0
      %487 = vmatprep.subr.bf16.mxu0 0
      %488 = vmatpush1.bf16.msra.mxu0 0
      %489 = vmatprep.subr.bf16.mxu0 0
      %490 = vmatpush1.bf16.msra.mxu0 0
      %491 = vmatprep.subr.bf16.mxu0 0
      %492 = vmatpush1.bf16.msra.mxu0 0
      %493 = vmatprep.subr.bf16.mxu0 0
      %494 = vmatpush1.bf16.msra.mxu0 0
      %495 = vmatprep.subr.bf16.mxu0 0
      %496 = vmatpush1.bf16.msra.mxu0 0
      %497 = vmatprep.subr.bf16.mxu0 0
      %498 = vmatpush1.bf16.msra.mxu0 0
      %499 = vmatprep.mubr.bf16.mxu0 0
      %500 = vmatmul.mubr.bf16.gmra.mrb[0].mxu0 %v410
      %v501 = vpop.f32.mrb[0].mxu0
      %v502 = vadd.f32 0.0, %v501
      %v503 = vpop.f32.mrb[0].mxu0
      %v504 = vpop.f32.mrb[0].mxu0
      %v505 = vadd.f32 0.0, %v504
      %v506 = vpop.f32.mrb[0].mxu0
      %507 = vdwg.mxu0
      %v508 = vadd.f32 %v453, %v502
      %v509 = vadd.f32 %v454, %v505
      %v511 = vsel %vm237, %v388, 0
      %513 = vmatprep.subr.bf16.mxu0 0
      %514 = vmatpush1.bf16.msra.mxu0 %v405
      %515 = vmatprep.subr.bf16.mxu0 0
      %516 = vmatpush1.bf16.msra.mxu0 %v406
      %517 = vmatprep.subr.bf16.mxu0 0
      %518 = vmatpush1.bf16.msra.mxu0 0
      %519 = vmatprep.subr.bf16.mxu0 0
      %520 = vmatpush1.bf16.msra.mxu0 0
      %521 = vmatprep.subr.bf16.mxu0 0
      %522 = vmatpush1.bf16.msra.mxu0 0
      %523 = vmatprep.subr.bf16.mxu0 0
      %524 = vmatpush1.bf16.msra.mxu0 0
      %525 = vmatprep.subr.bf16.mxu0 0
      %526 = vmatpush1.bf16.msra.mxu0 0
      %527 = vmatprep.subr.bf16.mxu0 0
      %528 = vmatpush1.bf16.msra.mxu0 0
      %529 = vmatprep.subr.bf16.mxu0 0
      %530 = vmatpush1.bf16.msra.mxu0 0
      %531 = vmatprep.subr.bf16.mxu0 0
      %532 = vmatpush1.bf16.msra.mxu0 0
      %533 = vmatprep.subr.bf16.mxu0 0
      %534 = vmatpush1.bf16.msra.mxu0 0
      %535 = vmatprep.subr.bf16.mxu0 0
      %536 = vmatpush1.bf16.msra.mxu0 0
      %537 = vmatprep.subr.bf16.mxu0 0
      %538 = vmatpush1.bf16.msra.mxu0 0
      %539 = vmatprep.subr.bf16.mxu0 0
      %540 = vmatpush1.bf16.msra.mxu0 0
      %541 = vmatprep.subr.bf16.mxu0 0
      %542 = vmatpush1.bf16.msra.mxu0 0
      %543 = vmatprep.subr.bf16.mxu0 0
      %544 = vmatpush1.bf16.msra.mxu0 0
      %545 = vmatprep.mubr.bf16.mxu0 0
      %546 = vmatmul.mubr.bf16.gmra.mrb[0].mxu0 %v511
      %v547 = vpop.f32.mrb[0].mxu0
      %v548 = vadd.f32 0.0, %v547
      %v549 = vpop.f32.mrb[0].mxu0
      %v550 = vpop.f32.mrb[0].mxu0
      %v551 = vadd.f32 0.0, %v550
      %v552 = vpop.f32.mrb[0].mxu0
      %553 = vdwg.mxu0
      %v554 = vadd.f32 %v508, %v548
      %v555 = vadd.f32 %v509, %v551
      %v556 = vld [vmem:[%s197 + $0x2] sm:$0xff]
      %v557 = vld [vmem:[%s197 + $0xa] sm:$0xff]
      %v558 = vpack.c.bf16 %v557, %v556
      %v559 = vunpack.c.l.bf16 %v558
      %v560 = vunpack.c.h.bf16 %v558
      %v561 = vsub.f32 %v556, %v559
      %v562 = vsub.f32 %v557, %v560
      %v563 = vpack.c.bf16 %v562, %v561
      %v564 = vld [vmem:[%s1 + $0x20] sm:$0xf]
      %v565 = vld [vmem:[%s1 + $0x24] sm:$0xf]
      %v566 = vld [vmem:[%s1 + $0x28] sm:$0xf]
      %v567 = vld [vmem:[%s1 + $0x2c] sm:$0xf]
      %v568 = vld [vmem:[%s2 + $0x20] sm:$0xf]
      %v569 = vld [vmem:[%s2 + $0x24] sm:$0xf]
      %v570 = vld [vmem:[%s2 + $0x28] sm:$0xf]
      %v571 = vld [vmem:[%s2 + $0x2c] sm:$0xf]
      %v576 = vunpack.c.l.b16 %v564
      %v577 = vunpack.c.l.b16 %v565
      %v578 = vunpack.c.l.b16 %v566
      %v579 = vunpack.c.l.b16 %v567
      %v580 = vpack.c.b16 %v577, %v576
      %v581 = vpack.c.b16 %v579, %v578
      %v585 = vsel %vm237, %v558, 0
      %587 = vmatprep.subr.bf16.mxu0 0
      %588 = vmatpush1.bf16.msra.mxu0 %v580
      %589 = vmatprep.subr.bf16.mxu0 0
      %590 = vmatpush1.bf16.msra.mxu0 %v581
      %591 = vmatprep.subr.bf16.mxu0 0
      %592 = vmatpush1.bf16.msra.mxu0 0
      %593 = vmatprep.subr.bf16.mxu0 0
      %594 = vmatpush1.bf16.msra.mxu0 0
      %595 = vmatprep.subr.bf16.mxu0 0
      %596 = vmatpush1.bf16.msra.mxu0 0
      %597 = vmatprep.subr.bf16.mxu0 0
      %598 = vmatpush1.bf16.msra.mxu0 0
      %599 = vmatprep.subr.bf16.mxu0 0
      %600 = vmatpush1.bf16.msra.mxu0 0
      %601 = vmatprep.subr.bf16.mxu0 0
      %602 = vmatpush1.bf16.msra.mxu0 0
      %603 = vmatprep.subr.bf16.mxu0 0
      %604 = vmatpush1.bf16.msra.mxu0 0
      %605 = vmatprep.subr.bf16.mxu0 0
      %606 = vmatpush1.bf16.msra.mxu0 0
      %607 = vmatprep.subr.bf16.mxu0 0
      %608 = vmatpush1.bf16.msra.mxu0 0
      %609 = vmatprep.subr.bf16.mxu0 0
      %610 = vmatpush1.bf16.msra.mxu0 0
      %611 = vmatprep.subr.bf16.mxu0 0
      %612 = vmatpush1.bf16.msra.mxu0 0
      %613 = vmatprep.subr.bf16.mxu0 0
      %614 = vmatpush1.bf16.msra.mxu0 0
      %615 = vmatprep.subr.bf16.mxu0 0
      %616 = vmatpush1.bf16.msra.mxu0 0
      %617 = vmatprep.subr.bf16.mxu0 0
      %618 = vmatpush1.bf16.msra.mxu0 0
      %619 = vmatprep.mubr.bf16.mxu0 0
      %620 = vmatmul.mubr.bf16.gmra.mrb[0].mxu0 %v585
      %v621 = vpop.f32.mrb[0].mxu0
      %v622 = vadd.f32 0.0, %v621
      %v623 = vpop.f32.mrb[0].mxu0
      %v624 = vpop.f32.mrb[0].mxu0
      %v625 = vadd.f32 0.0, %v624
      %v626 = vpop.f32.mrb[0].mxu0
      %627 = vdwg.mxu0
      %v628 = vadd.f32 %v554, %v622
      %v629 = vadd.f32 %v555, %v625
      %v634 = vunpack.c.l.b16 %v568
      %v635 = vunpack.c.l.b16 %v569
      %v636 = vunpack.c.l.b16 %v570
      %v637 = vunpack.c.l.b16 %v571
      %v638 = vpack.c.b16 %v635, %v634
      %v639 = vpack.c.b16 %v637, %v636
      %642 = vmatprep.subr.bf16.mxu0 0
      %643 = vmatpush1.bf16.msra.mxu0 %v638
      %644 = vmatprep.subr.bf16.mxu0 0
      %645 = vmatpush1.bf16.msra.mxu0 %v639
      %646 = vmatprep.subr.bf16.mxu0 0
      %647 = vmatpush1.bf16.msra.mxu0 0
      %648 = vmatprep.subr.bf16.mxu0 0
      %649 = vmatpush1.bf16.msra.mxu0 0
      %650 = vmatprep.subr.bf16.mxu0 0
      %651 = vmatpush1.bf16.msra.mxu0 0
      %652 = vmatprep.subr.bf16.mxu0 0
      %653 = vmatpush1.bf16.msra.mxu0 0
      %654 = vmatprep.subr.bf16.mxu0 0
      %655 = vmatpush1.bf16.msra.mxu0 0
      %656 = vmatprep.subr.bf16.mxu0 0
      %657 = vmatpush1.bf16.msra.mxu0 0
      %658 = vmatprep.subr.bf16.mxu0 0
      %659 = vmatpush1.bf16.msra.mxu0 0
      %660 = vmatprep.subr.bf16.mxu0 0
      %661 = vmatpush1.bf16.msra.mxu0 0
      %662 = vmatprep.subr.bf16.mxu0 0
      %663 = vmatpush1.bf16.msra.mxu0 0
      %664 = vmatprep.subr.bf16.mxu0 0
      %665 = vmatpush1.bf16.msra.mxu0 0
      %666 = vmatprep.subr.bf16.mxu0 0
      %667 = vmatpush1.bf16.msra.mxu0 0
      %668 = vmatprep.subr.bf16.mxu0 0
      %669 = vmatpush1.bf16.msra.mxu0 0
      %670 = vmatprep.subr.bf16.mxu0 0
      %671 = vmatpush1.bf16.msra.mxu0 0
      %672 = vmatprep.subr.bf16.mxu0 0
      %673 = vmatpush1.bf16.msra.mxu0 0
      %674 = vmatprep.mubr.bf16.mxu0 0
      %675 = vmatmul.mubr.bf16.gmra.mrb[0].mxu0 %v585
      %v676 = vpop.f32.mrb[0].mxu0
      %v677 = vadd.f32 0.0, %v676
      %v678 = vpop.f32.mrb[0].mxu0
      %v679 = vpop.f32.mrb[0].mxu0
      %v680 = vadd.f32 0.0, %v679
      %v681 = vpop.f32.mrb[0].mxu0
      %682 = vdwg.mxu0
      %v683 = vadd.f32 %v628, %v677
      %v684 = vadd.f32 %v629, %v680
      %v686 = vsel %vm237, %v563, 0
      %688 = vmatprep.subr.bf16.mxu0 0
      %689 = vmatpush1.bf16.msra.mxu0 %v580
      %690 = vmatprep.subr.bf16.mxu0 0
      %691 = vmatpush1.bf16.msra.mxu0 %v581
      %692 = vmatprep.subr.bf16.mxu0 0
      %693 = vmatpush1.bf16.msra.mxu0 0
      %694 = vmatprep.subr.bf16.mxu0 0
      %695 = vmatpush1.bf16.msra.mxu0 0
      %696 = vmatprep.subr.bf16.mxu0 0
      %697 = vmatpush1.bf16.msra.mxu0 0
      %698 = vmatprep.subr.bf16.mxu0 0
      %699 = vmatpush1.bf16.msra.mxu0 0
      %700 = vmatprep.subr.bf16.mxu0 0
      %701 = vmatpush1.bf16.msra.mxu0 0
      %702 = vmatprep.subr.bf16.mxu0 0
      %703 = vmatpush1.bf16.msra.mxu0 0
      %704 = vmatprep.subr.bf16.mxu0 0
      %705 = vmatpush1.bf16.msra.mxu0 0
      %706 = vmatprep.subr.bf16.mxu0 0
      %707 = vmatpush1.bf16.msra.mxu0 0
      %708 = vmatprep.subr.bf16.mxu0 0
      %709 = vmatpush1.bf16.msra.mxu0 0
      %710 = vmatprep.subr.bf16.mxu0 0
      %711 = vmatpush1.bf16.msra.mxu0 0
      %712 = vmatprep.subr.bf16.mxu0 0
      %713 = vmatpush1.bf16.msra.mxu0 0
      %714 = vmatprep.subr.bf16.mxu0 0
      %715 = vmatpush1.bf16.msra.mxu0 0
      %716 = vmatprep.subr.bf16.mxu0 0
      %717 = vmatpush1.bf16.msra.mxu0 0
      %718 = vmatprep.subr.bf16.mxu0 0
      %719 = vmatpush1.bf16.msra.mxu0 0
      %720 = vmatprep.mubr.bf16.mxu0 0
      %721 = vmatmul.mubr.bf16.gmra.mrb[0].mxu0 %v686
      %v722 = vpop.f32.mrb[0].mxu0
      %v723 = vadd.f32 0.0, %v722
      %v724 = vpop.f32.mrb[0].mxu0
      %v725 = vpop.f32.mrb[0].mxu0
      %v726 = vadd.f32 0.0, %v725
      %v727 = vpop.f32.mrb[0].mxu0
      %728 = vdwg.mxu0
      %v729 = vadd.f32 %v683, %v723
      %v730 = vadd.f32 %v684, %v726
      %v731 = vld [vmem:[%s197 + $0x3] sm:$0xff]
      %v732 = vld [vmem:[%s197 + $0xb] sm:$0xff]
      %v733 = vpack.c.bf16 %v732, %v731
      %v734 = vunpack.c.l.bf16 %v733
      %v735 = vunpack.c.h.bf16 %v733
      %v736 = vsub.f32 %v731, %v734
      %v737 = vsub.f32 %v732, %v735
      %v738 = vpack.c.bf16 %v737, %v736
      %v739 = vld [vmem:[%s1 + $0x30] sm:$0xf]
      %v740 = vld [vmem:[%s1 + $0x34] sm:$0xf]
      %v741 = vld [vmem:[%s1 + $0x38] sm:$0xf]
      %v742 = vld [vmem:[%s1 + $0x3c] sm:$0xf]
      %v743 = vld [vmem:[%s2 + $0x30] sm:$0xf]
      %v744 = vld [vmem:[%s2 + $0x34] sm:$0xf]
      %v745 = vld [vmem:[%s2 + $0x38] sm:$0xf]
      %v746 = vld [vmem:[%s2 + $0x3c] sm:$0xf]
      %v751 = vunpack.c.l.b16 %v739
      %v752 = vunpack.c.l.b16 %v740
      %v753 = vunpack.c.l.b16 %v741
      %v754 = vunpack.c.l.b16 %v742
      %v755 = vpack.c.b16 %v752, %v751
      %v756 = vpack.c.b16 %v754, %v753
      %v760 = vsel %vm237, %v733, 0
      %762 = vmatprep.subr.bf16.mxu0 0
      %763 = vmatpush1.bf16.msra.mxu0 %v755
      %764 = vmatprep.subr.bf16.mxu0 0
      %765 = vmatpush1.bf16.msra.mxu0 %v756
      %766 = vmatprep.subr.bf16.mxu0 0
      %767 = vmatpush1.bf16.msra.mxu0 0
      %768 = vmatprep.subr.bf16.mxu0 0
      %769 = vmatpush1.bf16.msra.mxu0 0
      %770 = vmatprep.subr.bf16.mxu0 0
      %771 = vmatpush1.bf16.msra.mxu0 0
      %772 = vmatprep.subr.bf16.mxu0 0
      %773 = vmatpush1.bf16.msra.mxu0 0
      %774 = vmatprep.subr.bf16.mxu0 0
      %775 = vmatpush1.bf16.msra.mxu0 0
      %776 = vmatprep.subr.bf16.mxu0 0
      %777 = vmatpush1.bf16.msra.mxu0 0
      %778 = vmatprep.subr.bf16.mxu0 0
      %779 = vmatpush1.bf16.msra.mxu0 0
      %780 = vmatprep.subr.bf16.mxu0 0
      %781 = vmatpush1.bf16.msra.mxu0 0
      %782 = vmatprep.subr.bf16.mxu0 0
      %783 = vmatpush1.bf16.msra.mxu0 0
      %784 = vmatprep.subr.bf16.mxu0 0
      %785 = vmatpush1.bf16.msra.mxu0 0
      %786 = vmatprep.subr.bf16.mxu0 0
      %787 = vmatpush1.bf16.msra.mxu0 0
      %788 = vmatprep.subr.bf16.mxu0 0
      %789 = vmatpush1.bf16.msra.mxu0 0
      %790 = vmatprep.subr.bf16.mxu0 0
      %791 = vmatpush1.bf16.msra.mxu0 0
      %792 = vmatprep.subr.bf16.mxu0 0
      %793 = vmatpush1.bf16.msra.mxu0 0
      %794 = vmatprep.mubr.bf16.mxu0 0
      %795 = vmatmul.mubr.bf16.gmra.mrb[0].mxu0 %v760
      %v796 = vpop.f32.mrb[0].mxu0
      %v797 = vadd.f32 0.0, %v796
      %v798 = vpop.f32.mrb[0].mxu0
      %v799 = vpop.f32.mrb[0].mxu0
      %v800 = vadd.f32 0.0, %v799
      %v801 = vpop.f32.mrb[0].mxu0
      %802 = vdwg.mxu0
      %v803 = vadd.f32 %v729, %v797
      %v804 = vadd.f32 %v730, %v800
      %v809 = vunpack.c.l.b16 %v743
      %v810 = vunpack.c.l.b16 %v744
      %v811 = vunpack.c.l.b16 %v745
      %v812 = vunpack.c.l.b16 %v746
      %v813 = vpack.c.b16 %v810, %v809
      %v814 = vpack.c.b16 %v812, %v811
      %817 = vmatprep.subr.bf16.mxu0 0
      %818 = vmatpush1.bf16.msra.mxu0 %v813
      %819 = vmatprep.subr.bf16.mxu0 0
      %820 = vmatpush1.bf16.msra.mxu0 %v814
      %821 = vmatprep.subr.bf16.mxu0 0
      %822 = vmatpush1.bf16.msra.mxu0 0
      %823 = vmatprep.subr.bf16.mxu0 0
      %824 = vmatpush1.bf16.msra.mxu0 0
      %825 = vmatprep.subr.bf16.mxu0 0
      %826 = vmatpush1.bf16.msra.mxu0 0
      %827 = vmatprep.subr.bf16.mxu0 0
      %828 = vmatpush1.bf16.msra.mxu0 0
      %829 = vmatprep.subr.bf16.mxu0 0
      %830 = vmatpush1.bf16.msra.mxu0 0
      %831 = vmatprep.subr.bf16.mxu0 0
      %832 = vmatpush1.bf16.msra.mxu0 0
      %833 = vmatprep.subr.bf16.mxu0 0
      %834 = vmatpush1.bf16.msra.mxu0 0
      %835 = vmatprep.subr.bf16.mxu0 0
      %836 = vmatpush1.bf16.msra.mxu0 0
      %837 = vmatprep.subr.bf16.mxu0 0
      %838 = vmatpush1.bf16.msra.mxu0 0
      %839 = vmatprep.subr.bf16.mxu0 0
      %840 = vmatpush1.bf16.msra.mxu0 0
      %841 = vmatprep.subr.bf16.mxu0 0
      %842 = vmatpush1.bf16.msra.mxu0 0
      %843 = vmatprep.subr.bf16.mxu0 0
      %844 = vmatpush1.bf16.msra.mxu0 0
      %845 = vmatprep.subr.bf16.mxu0 0
      %846 = vmatpush1.bf16.msra.mxu0 0
      %847 = vmatprep.subr.bf16.mxu0 0
      %848 = vmatpush1.bf16.msra.mxu0 0
      %849 = vmatprep.mubr.bf16.mxu0 0
      %850 = vmatmul.mubr.bf16.gmra.mrb[0].mxu0 %v760
      %v851 = vpop.f32.mrb[0].mxu0
      %v852 = vadd.f32 0.0, %v851
      %v853 = vpop.f32.mrb[0].mxu0
      %v854 = vpop.f32.mrb[0].mxu0
      %v855 = vadd.f32 0.0, %v854
      %v856 = vpop.f32.mrb[0].mxu0
      %857 = vdwg.mxu0
      %v858 = vadd.f32 %v803, %v852
      %v859 = vadd.f32 %v804, %v855
      %v861 = vsel %vm237, %v738, 0
      %863 = vmatprep.subr.bf16.mxu0 0
      %864 = vmatpush1.bf16.msra.mxu0 %v755
      %865 = vmatprep.subr.bf16.mxu0 0
      %866 = vmatpush1.bf16.msra.mxu0 %v756
      %867 = vmatprep.subr.bf16.mxu0 0
      %868 = vmatpush1.bf16.msra.mxu0 0
      %869 = vmatprep.subr.bf16.mxu0 0
      %870 = vmatpush1.bf16.msra.mxu0 0
      %871 = vmatprep.subr.bf16.mxu0 0
      %872 = vmatpush1.bf16.msra.mxu0 0
      %873 = vmatprep.subr.bf16.mxu0 0
      %874 = vmatpush1.bf16.msra.mxu0 0
      %875 = vmatprep.subr.bf16.mxu0 0
      %876 = vmatpush1.bf16.msra.mxu0 0
      %877 = vmatprep.subr.bf16.mxu0 0
      %878 = vmatpush1.bf16.msra.mxu0 0
      %879 = vmatprep.subr.bf16.mxu0 0
      %880 = vmatpush1.bf16.msra.mxu0 0
      %881 = vmatprep.subr.bf16.mxu0 0
      %882 = vmatpush1.bf16.msra.mxu0 0
      %883 = vmatprep.subr.bf16.mxu0 0
      %884 = vmatpush1.bf16.msra.mxu0 0
      %885 = vmatprep.subr.bf16.mxu0 0
      %886 = vmatpush1.bf16.msra.mxu0 0
      %887 = vmatprep.subr.bf16.mxu0 0
      %888 = vmatpush1.bf16.msra.mxu0 0
      %889 = vmatprep.subr.bf16.mxu0 0
      %890 = vmatpush1.bf16.msra.mxu0 0
      %891 = vmatprep.subr.bf16.mxu0 0
      %892 = vmatpush1.bf16.msra.mxu0 0
      %893 = vmatprep.subr.bf16.mxu0 0
      %894 = vmatpush1.bf16.msra.mxu0 0
      %895 = vmatprep.mubr.bf16.mxu0 0
      %896 = vmatmul.mubr.bf16.gmra.mrb[0].mxu0 %v861
      %v897 = vpop.f32.mrb[0].mxu0
      %v898 = vadd.f32 0.0, %v897
      %v899 = vpop.f32.mrb[0].mxu0
      %v900 = vpop.f32.mrb[0].mxu0
      %v901 = vadd.f32 0.0, %v900
      %v902 = vpop.f32.mrb[0].mxu0
      %903 = vdwg.mxu0
      %v904 = vadd.f32 %v858, %v898
      %v905 = vadd.f32 %v859, %v901
      %v906 = vlaneseq
      %v907 = vand.u32 %v906, 127
      %v908 = vmul.f32 %v904, %v904
      %v909 = vmul.f32 %v905, %v905
      %vm910 = vcmp.eq.s32.totalorder %v907, 0
      %913 = vrot.lane.b32.xlu0 %v908, 64
      %v914 = vpop.permute.xlu0 %913
      %915 = vrot.lane.b32.xlu0 %v909, 64
      %v916 = vpop.permute.xlu0 %915
      %v919 = vsel %vm910, 0.0, %v914
      %v920 = vsel %vm910, 0.0, %v916
      %v921 = vadd.f32 %v908, %v919
      %v922 = vadd.f32 %v909, %v920
      %v923 = vmax.f32 %v921, 1e-07
      %v924 = vmax.f32 %v922, 1e-07
      %v925 = vrsqrt.pop %v923
      %v926 = vmul.f32 %v923, %v925
      %vm927 = vcmp.eq.f32.partialorder %v923, inf
      %v928 = vsel %vm927, %v923, %v926
      %vm929 = vcmp.eq.f32.partialorder %v923, 0.0
      %v930 = vand.u32 %v923, 2147483648
      %v931 = vsel %vm929, %v930, %v928
      %v932 = vrsqrt.pop %v924
      %v933 = vmul.f32 %v924, %v932
      %vm934 = vcmp.eq.f32.partialorder %v924, inf
      %v935 = vsel %vm934, %v924, %v933
      %vm936 = vcmp.eq.f32.partialorder %v924, 0.0
      %v937 = vand.u32 %v924, 2147483648
      %v938 = vsel %vm936, %v937, %v935
      %vm939 = vcmask 523264
      %940 = vst.msk [vmem:[%s206] sm:$0xff] %vm939, %v931
      %941 = vst.msk [vmem:[%s206 + $0x8] sm:$0xff] %vm939, %v938
      %v942 = vmax.f32 %v908, 1e-07
      %v943 = vmax.f32 %v909, 1e-07
      %v944 = vrsqrt.pop %v942
      %v945 = vmul.f32 %v942, %v944
      %vm946 = vcmp.eq.f32.partialorder %v942, inf
      %v947 = vsel %vm946, %v942, %v945
      %vm948 = vcmp.eq.f32.partialorder %v942, 0.0
      %v949 = vand.u32 %v942, 2147483648
      %v950 = vsel %vm948, %v949, %v947
      %v951 = vrsqrt.pop %v943
      %v952 = vmul.f32 %v943, %v951
      %vm953 = vcmp.eq.f32.partialorder %v943, inf
      %v954 = vsel %vm953, %v943, %v952
      %vm955 = vcmp.eq.f32.partialorder %v943, 0.0
      %v956 = vand.u32 %v943, 2147483648
      %v957 = vsel %vm955, %v956, %v954
      %vm958 = vcmask 531968
      %959 = vst.msk [vmem:[%s206] sm:$0xff] %vm958, %v950
      %960 = vst.msk [vmem:[%s206 + $0x8] sm:$0xff] %vm958, %v957
      %s961 = smul.u32 2, %s19
      %p962 = scmp.lt.s32.totalorder %s18, 1
      %s963 = scalar_select %p962, %s18, 1
      %p964 = scmp.lt.s32.totalorder %s961, 1
      %s965 = scalar_select %p964, %s961, 1
      %s966 = smul.addr %s963, 2
      %s967 = sadd.s32 %s965, %s966
      %s968 = smul.addr %s967, 8
      %s969 = scalar_lea.vmem %s3, %s968
      // Predicated region
      $region33: #{a_call__.1} parent=31 // pred_check
        %p970 = pneg %p116
      $region34: #{a_call__.1} parent=31 // pred_check_branch
        %972 = sbr.rel (%p970) target = $region36
      $region35: #{a_call__.1} parent=31 // pred_region
        %s973 = smul.u32 2, %s19
      $region36: #{a_call__.1} parent=31 // pred_fallthru
        _
    $region32: #{a_call__.1} parent=5 // pred_fallthru
      _
    %p974 = scmp.le.s32.totalorder 2, %s9
    // Predicated region
    $region37: #{a_call__.1} parent=5 // pred_check
      %p975 = pneg %p974
    $region38: #{a_call__.1} parent=5 // pred_check_branch
      %977 = sbr.rel (%p975) target = $region40
    $region39: #{a_call__.1} parent=5 // pred_region
      %s978 = ssub.s32 %s9, 2
      // Predicated region
      $region41: #{a_call__.1} parent=39 // pred_check
        %p979 = pneg %p122
      $region42: #{a_call__.1} parent=39 // pred_check_branch
        %981 = sbr.rel (%p979) target = $region44
      $region43: #{a_call__.1} parent=39 // pred_region
        %s982 = smul.u32 2, %s21
        %p983 = scmp.lt.s32.totalorder %s20, 1
        %s984 = scalar_select %p983, %s20, 1
        %p985 = scmp.lt.s32.totalorder %s982, 1
        %s986 = scalar_select %p985, %s982, 1
        %s987 = smul.addr %s984, 2
        %s988 = sadd.s32 %s986, %s987
        %s989 = smul.addr %s988, 8
        %s990 = scalar_lea.vmem %s3, %s989
      $region44: #{a_call__.1} parent=39 // pred_fallthru
        _
    $region40: #{a_call__.1} parent=5 // pred_fallthru
      _
  $region6: #{a_call__.1} parent=0 // loop_footer
    %s13 = sadd.s32 1, %s9
  $region7: #{a_call__.1} parent=0 // loop_footer_branch
    %8 = sbr.rel target = $region3
  $region8: #{a_call__.1} parent=0 // loop_exit
    _

</llo_original>
